<compile_context>
chip_gen: v6e
topology: v6e:2x2x1
jax: 0.10.0
libtpu: 0.0.40
codegen_flags: <defaults>
</compile_context>

<pallas_src>
import functools

import jax
import jax.numpy as jnp
from jax.experimental import pallas as pl
from jax.experimental.pallas import tpu as pltpu

HIDDEN = 128


def actor_critic_kernel(x_ref, w1_ref, b1_ref, w2p_ref, b2p_ref,
                        w2v_ref, b2v_ref, pi_ref, v_ref):
    # Layer 1 (actor + critic fused, N = 256): bf16 x bf16 -> f32 accumulate (MXU).
    h = jnp.dot(x_ref[...], w1_ref[...], preferred_element_type=jnp.float32)
    h = jnp.maximum(h + b1_ref[...], 0.0)                 # bias + ReLU in f32 (VPU)

    # Actor head: MXU matmul, bf16 operands, f32 accumulate; lane-dense bf16 store.
    h_pi = h[:, :HIDDEN].astype(w2p_ref.dtype)
    pi = jnp.dot(h_pi, w2p_ref[...], preferred_element_type=jnp.float32)
    pi_ref[...] = (pi + b2p_ref[...]).astype(pi_ref.dtype)

    # Critic head (single column): VPU multiply + XLU lane reduce, all f32.
    h_v = h[:, HIDDEN:]                                   # (tile, 128) f32
    v_col = jnp.sum(h_v * w2v_ref[...], axis=-1, keepdims=True)    # (tile, 1)
    v_ref[...] = jnp.broadcast_to(v_col, v_ref.shape) + b2v_ref[...]


def _round_up(x, m):
    return (x + m - 1) // m * m


def init_params(key, input_dim, output_dim):
    """nn.Linear-style init; weights stored pre-transposed as (in, out)."""
    ks = jax.random.split(key, 8)

    def linear(kw, kb, fan_in, fan_out):
        bound = 1.0 / jnp.sqrt(fan_in)
        w = jax.random.uniform(kw, (fan_in, fan_out), jnp.float32, -bound, bound)
        b = jax.random.uniform(kb, (1, fan_out), jnp.float32, -bound, bound)
        return w, b

    wpi1, bpi1 = linear(ks[0], ks[1], input_dim, HIDDEN)
    wv1, bv1 = linear(ks[2], ks[3], input_dim, HIDDEN)
    wpi2, bpi2 = linear(ks[4], ks[5], HIDDEN, output_dim)
    wv2, bv2 = linear(ks[6], ks[7], HIDDEN, 1)
    return dict(wpi1=wpi1, bpi1=bpi1, wv1=wv1, bv1=bv1,
                wpi2=wpi2, bpi2=bpi2, wv2=wv2, bv2=bv2)


def pack_params(p, compute_dtype=jnp.bfloat16):
    """Fuse the two layer-1 branches; keep the critic head weights in f32."""
    f32 = jnp.float32
    w1 = jnp.concatenate([p["wpi1"], p["wv1"]], axis=1)       # (in, 256)
    b1 = jnp.concatenate([p["bpi1"], p["bv1"]], axis=1)       # (1, 256)
    return dict(
        w1=w1.astype(compute_dtype), b1=b1.astype(f32),
        w2pi=p["wpi2"].astype(compute_dtype),                 # (128, out) bf16
        b2pi=p["bpi2"].astype(f32),                           # (1, out)
        w2v=p["wv2"].T.astype(f32),                           # (1, 128) f32
        b2v=jnp.broadcast_to(p["bv2"], (1, HIDDEN)).astype(f32))  # (1, 128) f32


@functools.partial(jax.jit, static_argnames=("tile_b", "core_parallel"))
def actor_critic_forward(state, fused, *, tile_b=512, core_parallel=False):
    """state: (B, input_dim) f32.  fused: output of pack_params.  Returns (pi, v)."""
    B, input_dim = state.shape
    output_dim = fused["w2pi"].shape[1]

    # Large batches stream 512-row tiles (double-buffered by the BlockSpec
    # pipeline); small batches collapse to one multiple-of-8 tile.
    tile = min(tile_b, _round_up(B, 8))
    b_pad = _round_up(B, tile)

    x = state.astype(fused["w1"].dtype)
    if b_pad != B:
        x = jnp.pad(x, ((0, b_pad - B), (0, 0)))

    const = lambda i: (0, 0)   # weights/biases resident in VMEM, DMA'd once
    dims = (pltpu.CORE_PARALLEL,) if core_parallel else ("parallel",)

    pi, v_pad = pl.pallas_call(
        actor_critic_kernel,
        out_shape=(
            jax.ShapeDtypeStruct((b_pad, output_dim), jnp.bfloat16),  # pi (bf16)
            jax.ShapeDtypeStruct((b_pad, HIDDEN), jnp.float32),       # v  (f32)
        ),
        grid=(b_pad // tile,),
        in_specs=[
            pl.BlockSpec((tile, input_dim), lambda i: (i, 0)),
            pl.BlockSpec(fused["w1"].shape, const),
            pl.BlockSpec(fused["b1"].shape, const),
            pl.BlockSpec(fused["w2pi"].shape, const),
            pl.BlockSpec(fused["b2pi"].shape, const),
            pl.BlockSpec(fused["w2v"].shape, const),
            pl.BlockSpec(fused["b2v"].shape, const),
        ],
        out_specs=(
            pl.BlockSpec((tile, output_dim), lambda i: (i, 0)),
            pl.BlockSpec((tile, HIDDEN), lambda i: (i, 0)),
        ),
        compiler_params=pltpu.CompilerParams(dimension_semantics=dims),
    )(x, fused["w1"], fused["b1"], fused["w2pi"], fused["b2pi"],
      fused["w2v"], fused["b2v"])

    pi = pi[:B] if b_pad != B else pi      # no-copy when B is a tile multiple
    v = v_pad[:B, :1]                      # tiny (B, 1) slice of the critic lanes
    return pi, v


def reference_forward_f32(state, p):
    """Pure f32 reference with the original (unfused) parameters."""
    pi1 = jnp.maximum(state @ p["wpi1"] + p["bpi1"], 0.0)
    v1 = jnp.maximum(state @ p["wv1"] + p["bv1"], 0.0)
    return pi1 @ p["wpi2"] + p["bpi2"], v1 @ p["wv2"] + p["bv2"]


def reference_forward_fused(state, fused):
    """Precision-matched reference: same bf16-rounded operands, f32 accumulation."""
    f32 = jnp.float32
    cd = fused["w1"].dtype
    x = state.astype(cd).astype(f32)
    h = jnp.maximum(x @ fused["w1"].astype(f32) + fused["b1"], 0.0)
    h_pi = h[:, :HIDDEN].astype(cd).astype(f32)
    pi = (h_pi @ fused["w2pi"].astype(f32) + fused["b2pi"]).astype(jnp.bfloat16)
    v = (jnp.sum(h[:, HIDDEN:] * fused["w2v"], axis=-1, keepdims=True)
         + fused["b2v"][:, :1])
    return pi, v


def _check(pi, v, state, fused, params):
    pi_ref, v_ref = reference_forward_fused(state, fused)
    assert jnp.allclose(pi.astype(jnp.float32), pi_ref.astype(jnp.float32),
                        atol=1e-2, rtol=1e-2)
    assert jnp.allclose(v, v_ref, atol=2e-3, rtol=2e-3)
    pi_f32, v_f32 = reference_forward_f32(state, params)
    assert jnp.allclose(pi.astype(jnp.float32), pi_f32, atol=7.5e-2)
    assert jnp.allclose(v, v_f32, atol=5e-2)


if __name__ == "__main__":
    key = jax.random.PRNGKey(0)
    k_state, k_params, k_big = jax.random.split(key, 3)

    batch = 2
    input_dim = 64       # e.g. flattened 8x8 board observation
    output_dim = 256     # action-space logits

    params = init_params(k_params, input_dim, output_dim)
    fused = pack_params(params)

    # Small-batch RL-inference path (single grid step).
    state = jax.random.normal(k_state, (batch, input_dim), jnp.float32)
    pi, v = actor_critic_forward(state, fused)
    jax.block_until_ready((pi, v))
    assert pi.shape == (batch, output_dim) and v.shape == (batch, 1)
    _check(pi, v, state, fused, params)

    # Multi-tile path: 1024 rows -> two 512-row grid steps through the pipeline.
    state_big = jax.random.normal(k_big, (1024, input_dim), jnp.float32)
    pi_b, v_b = actor_critic_forward(state_big, fused)
    jax.block_until_ready((pi_b, v_b))
    assert pi_b.shape == (1024, output_dim) and v_b.shape == (1024, 1)
    _check(pi_b, v_b, state_big, fused, params)

    # TODO(synk): action masking / Categorical sampling and the training loop
    # are host-side RL control flow, not part of the module forward pass.
    print("KERNEL_OK")
</pallas_src>

<mosaic_0001>
module attributes {stable_mosaic.version = 11 : i64} {
  func.func @actor_critic_kernel(%arg0: i32, %arg1: memref<8x64xbf16, #tpu.memory_space<vmem>>, %arg2: memref<64x256xbf16, #tpu.memory_space<vmem>>, %arg3: memref<1x256xf32, #tpu.memory_space<vmem>>, %arg4: memref<128x256xbf16, #tpu.memory_space<vmem>>, %arg5: memref<1x256xf32, #tpu.memory_space<vmem>>, %arg6: memref<1x128xf32, #tpu.memory_space<vmem>>, %arg7: memref<1x128xf32, #tpu.memory_space<vmem>>, %arg8: memref<8x256xbf16, #tpu.memory_space<vmem>>, %arg9: memref<8x128xf32, #tpu.memory_space<vmem>>) attributes {dimension_semantics = [#tpu.dimension_semantics<parallel>], iteration_bounds = array<i64: 1>, scalar_prefetch = 0 : i64, scratch_operands = 0 : i64, tpu.core_type = #tpu.core_type<tc>, window_params = [{transform_indices = @transform_0, window_bounds = array<i64: 8, 64>}, {pipeline_mode = #tpu.pipeline_mode<synchronous>, transform_indices = @transform_1, window_bounds = array<i64: 64, 256>}, {pipeline_mode = #tpu.pipeline_mode<synchronous>, transform_indices = @transform_2, window_bounds = array<i64: 1, 256>}, {pipeline_mode = #tpu.pipeline_mode<synchronous>, transform_indices = @transform_3, window_bounds = array<i64: 128, 256>}, {pipeline_mode = #tpu.pipeline_mode<synchronous>, transform_indices = @transform_4, window_bounds = array<i64: 1, 256>}, {pipeline_mode = #tpu.pipeline_mode<synchronous>, transform_indices = @transform_5, window_bounds = array<i64: 1, 128>}, {pipeline_mode = #tpu.pipeline_mode<synchronous>, transform_indices = @transform_6, window_bounds = array<i64: 1, 128>}, {transform_indices = @transform_7, window_bounds = array<i64: 8, 256>}, {transform_indices = @transform_8, window_bounds = array<i64: 8, 128>}]} {
    %c0 = arith.constant 0 : index
    %c0_0 = arith.constant 0 : index
    %0 = vector.load %arg1[%c0, %c0_0] : memref<8x64xbf16, #tpu.memory_space<vmem>>, vector<8x64xbf16>
    %c0_1 = arith.constant 0 : index
    %c0_2 = arith.constant 0 : index
    %1 = vector.load %arg2[%c0_1, %c0_2] : memref<64x256xbf16, #tpu.memory_space<vmem>>, vector<64x256xbf16>
    %cst = arith.constant dense<0.000000e+00> : vector<8x256xf32>
    %2 = tpu.matmul %0, %1, %cst {dimension_numbers = #tpu.dot_dimension_numbers<[1], [0], [0], [1], [0, 0, 1, 1], [], []>} : vector<8x64xbf16>, vector<64x256xbf16>, vector<8x256xf32> -> vector<8x256xf32>
    %c0_3 = arith.constant 0 : index
    %c0_4 = arith.constant 0 : index
    %3 = vector.load %arg3[%c0_3, %c0_4] : memref<1x256xf32, #tpu.memory_space<vmem>>, vector<1x256xf32>
    %4 = vector.broadcast %3 : vector<1x256xf32> to vector<8x256xf32>
    %5 = arith.addf %2, %4 : vector<8x256xf32>
    %cst_5 = arith.constant 0.000000e+00 : f32
    %6 = vector.broadcast %cst_5 : f32 to vector<8x256xf32>
    %7 = arith.maximumf %5, %6 : vector<8x256xf32>
    %8 = vector.extract_strided_slice %7 {offsets = [0, 0], sizes = [8, 128], strides = [1, 1]} : vector<8x256xf32> to vector<8x128xf32>
    %9 = arith.truncf %8 : vector<8x128xf32> to vector<8x128xbf16>
    %c0_6 = arith.constant 0 : index
    %c0_7 = arith.constant 0 : index
    %10 = vector.load %arg4[%c0_6, %c0_7] : memref<128x256xbf16, #tpu.memory_space<vmem>>, vector<128x256xbf16>
    %cst_8 = arith.constant dense<0.000000e+00> : vector<8x256xf32>
    %11 = tpu.matmul %9, %10, %cst_8 {dimension_numbers = #tpu.dot_dimension_numbers<[1], [0], [0], [1], [0, 0, 1, 1], [], []>} : vector<8x128xbf16>, vector<128x256xbf16>, vector<8x256xf32> -> vector<8x256xf32>
    %c0_9 = arith.constant 0 : index
    %c0_10 = arith.constant 0 : index
    %12 = vector.load %arg5[%c0_9, %c0_10] : memref<1x256xf32, #tpu.memory_space<vmem>>, vector<1x256xf32>
    %13 = vector.broadcast %12 : vector<1x256xf32> to vector<8x256xf32>
    %14 = arith.addf %11, %13 : vector<8x256xf32>
    %15 = arith.truncf %14 : vector<8x256xf32> to vector<8x256xbf16>
    %c0_11 = arith.constant 0 : index
    %c0_12 = arith.constant 0 : index
    %16 = vector.load %arg8[%c0_11, %c0_12] : memref<8x256xbf16, #tpu.memory_space<vmem>>, vector<8x256xbf16>
    tpu.vector_store %arg8[%c0_11, %c0_12], %15 {strides = array<i32>} : memref<8x256xbf16, #tpu.memory_space<vmem>>, vector<8x256xbf16>,
    %17 = vector.extract_strided_slice %7 {offsets = [0, 128], sizes = [8, 128], strides = [1, 1]} : vector<8x256xf32> to vector<8x128xf32>
    %c0_13 = arith.constant 0 : index
    %c0_14 = arith.constant 0 : index
    %18 = vector.load %arg6[%c0_13, %c0_14] : memref<1x128xf32, #tpu.memory_space<vmem>>, vector<1x128xf32>
    %19 = vector.broadcast %18 : vector<1x128xf32> to vector<8x128xf32>
    %20 = arith.mulf %17, %19 : vector<8x128xf32>
    %cst_15 = arith.constant dense<0.000000e+00> : vector<8xf32>
    %21 = vector.multi_reduction <add>, %20, %cst_15 [1] : vector<8x128xf32> to vector<8xf32>
    %22 = vector.shape_cast %21 : vector<8xf32> to vector<8x1xf32>
    %23 = vector.shape_cast %22 : vector<8x1xf32> to vector<8x1xf32>
    %24 = vector.broadcast %23 : vector<8x1xf32> to vector<8x128xf32>
    %c0_16 = arith.constant 0 : index
    %c0_17 = arith.constant 0 : index
    %25 = vector.load %arg7[%c0_16, %c0_17] : memref<1x128xf32, #tpu.memory_space<vmem>>, vector<1x128xf32>
    %26 = vector.broadcast %25 : vector<1x128xf32> to vector<8x128xf32>
    %27 = arith.addf %24, %26 : vector<8x128xf32>
    %c0_18 = arith.constant 0 : index
    %c0_19 = arith.constant 0 : index
    %28 = vector.load %arg9[%c0_18, %c0_19] : memref<8x128xf32, #tpu.memory_space<vmem>>, vector<8x128xf32>
    tpu.vector_store %arg9[%c0_18, %c0_19], %27 {strides = array<i32>} : memref<8x128xf32, #tpu.memory_space<vmem>>, vector<8x128xf32>,
    return
  }
  func.func @transform_0(%arg0: i32) -> (i32, i32) {
    %c0_i32 = arith.constant 0 : i32
    %c0_i32_0 = arith.constant 0 : i32
    return %arg0, %c0_i32 : i32, i32
  }
  func.func @transform_1(%arg0: i32) -> (i32, i32) {
    %c0_i32 = arith.constant 0 : i32
    %c0_i32_0 = arith.constant 0 : i32
    %c0_i32_1 = arith.constant 0 : i32
    return %c0_i32, %c0_i32_0 : i32, i32
  }
  func.func @transform_2(%arg0: i32) -> (i32, i32) {
    %c0_i32 = arith.constant 0 : i32
    %c0_i32_0 = arith.constant 0 : i32
    %c0_i32_1 = arith.constant 0 : i32
    return %c0_i32, %c0_i32_0 : i32, i32
  }
  func.func @transform_3(%arg0: i32) -> (i32, i32) {
    %c0_i32 = arith.constant 0 : i32
    %c0_i32_0 = arith.constant 0 : i32
    %c0_i32_1 = arith.constant 0 : i32
    return %c0_i32, %c0_i32_0 : i32, i32
  }
  func.func @transform_4(%arg0: i32) -> (i32, i32) {
    %c0_i32 = arith.constant 0 : i32
    %c0_i32_0 = arith.constant 0 : i32
    %c0_i32_1 = arith.constant 0 : i32
    return %c0_i32, %c0_i32_0 : i32, i32
  }
  func.func @transform_5(%arg0: i32) -> (i32, i32) {
    %c0_i32 = arith.constant 0 : i32
    %c0_i32_0 = arith.constant 0 : i32
    %c0_i32_1 = arith.constant 0 : i32
    return %c0_i32, %c0_i32_0 : i32, i32
  }
  func.func @transform_6(%arg0: i32) -> (i32, i32) {
    %c0_i32 = arith.constant 0 : i32
    %c0_i32_0 = arith.constant 0 : i32
    %c0_i32_1 = arith.constant 0 : i32
    return %c0_i32, %c0_i32_0 : i32, i32
  }
  func.func @transform_7(%arg0: i32) -> (i32, i32) {
    %c0_i32 = arith.constant 0 : i32
    %c0_i32_0 = arith.constant 0 : i32
    return %arg0, %c0_i32 : i32, i32
  }
  func.func @transform_8(%arg0: i32) -> (i32, i32) {
    %c0_i32 = arith.constant 0 : i32
    %c0_i32_0 = arith.constant 0 : i32
    return %arg0, %c0_i32 : i32, i32
  }
}

</mosaic_0001>

<llo_original>
// kernel: actor_critic_forward.1
$region0: #{actor_critic_forward.1}
  #allocation0 [shape = 'u32[]', space=smem, size = 0x4, offset = 0x4, fixed_abs, tag = 'smem constant byte address 0x4 - core index']
  #allocation1 [shape = 'u32[144,128]{1,0:T(1,128)}', space=vmem, size = 0x12000, scoped, tag = 'internal scratch']
  %s0 = inlined_call_operand.vmem [shape: bf16[8,64], index: 0, kind: input, shape index: {}]
  %s1 = inlined_call_operand.hbm [shape: bf16[64,256], index: 1, kind: input, shape index: {}]
  %s2 = inlined_call_operand.vmem [shape: f32[1,256], index: 2, kind: input, shape index: {}]
  %s3 = inlined_call_operand.hbm [shape: bf16[128,256], index: 3, kind: input, shape index: {}]
  %s4 = inlined_call_operand.vmem [shape: f32[1,256], index: 4, kind: input, shape index: {}]
  %s5 = inlined_call_operand.vmem [shape: f32[1,128], index: 5, kind: input, shape index: {}]
  %s6 = inlined_call_operand.vmem [shape: f32[1,128], index: 6, kind: input, shape index: {}]
  %s7 = inlined_call_operand.vmem [shape: bf16[8,256], index: 7, kind: output, shape index: {0}]
  %s8 = inlined_call_operand.vmem [shape: f32[8,128], index: 8, kind: output, shape index: {1}]
  %9 = xla_tuple %s7, %s8
  %s10 = sld [smem:[#allocation0]]
  $region54: #{actor_critic_forward.1} parent=0
    _
  %s12 = ssub.s32 1, %s10
  %s13 = scalar_select 0, %s12, %s10
  $region1: #{actor_critic_forward.1} parent=0
    #allocation2 [shape = 'u8[32768]{0}', space=vmem, size = 0x8000, scoped, tag = 'input window, operand 1, single buffered']
    #allocation3 [shape = 's32[1]{0}', space=sflag, size = 0x4, scoped, tag = 'scoped memory for actor_critic_forward.1']
    #allocation4 [shape = 'u8[65536]{0}', space=vmem, size = 0x10000, scoped, tag = 'input window, operand 3, single buffered']
    #allocation5 [shape = 's32[1]{0}', space=sflag, size = 0x4, scoped, tag = 'scoped memory for actor_critic_forward.1']
    %14 = vsyncpa [#allocation3], 0
    %15 = vsyncpa [#allocation5], 0
    // Predicated region
    $region2: #{actor_critic_forward.1} parent=1 // pred_check
      _
    $region3: #{actor_critic_forward.1} parent=1 // pred_check_branch
      %17 = sbr.rel (0) target = $region5
    $region4: #{actor_critic_forward.1} parent=1 // pred_region
      _
    $region5: #{actor_critic_forward.1} parent=1 // pred_fallthru
      _
    // Predicated region
    $region6: #{actor_critic_forward.1} parent=1 // pred_check
      _
    $region7: #{actor_critic_forward.1} parent=1 // pred_check_branch
      %19 = sbr.rel (0) target = $region9
    $region8: #{actor_critic_forward.1} parent=1 // pred_region
      %s21 = ssub.s32 1024, 1024
      %22 = vsyncadd [#allocation3], %s21
      %s23 = sshll.u32 [#allocation2], 4
      %s24 = int_to_ptr.vmem [resolvable:$true] %s23
      %29 = dma.hbm_to_vmem [thread:$0]  %s1, 1024, %s24, [#allocation3], 128, 128, 8
    $region9: #{actor_critic_forward.1} parent=1 // pred_fallthru
      _
    // Predicated region
    $region10: #{actor_critic_forward.1} parent=1 // pred_check
      _
    $region11: #{actor_critic_forward.1} parent=1 // pred_check_branch
      %31 = sbr.rel (0) target = $region13
    $region12: #{actor_critic_forward.1} parent=1 // pred_region
      _
    $region13: #{actor_critic_forward.1} parent=1 // pred_fallthru
      _
    // Predicated region
    $region14: #{actor_critic_forward.1} parent=1 // pred_check
      _
    $region15: #{actor_critic_forward.1} parent=1 // pred_check_branch
      %33 = sbr.rel (0) target = $region17
    $region16: #{actor_critic_forward.1} parent=1 // pred_region
      %s35 = ssub.s32 2048, 2048
      %36 = vsyncadd [#allocation5], %s35
      %s37 = sshll.u32 [#allocation4], 4
      %s38 = int_to_ptr.vmem [resolvable:$true] %s37
      %43 = dma.hbm_to_vmem [thread:$0]  %s3, 2048, %s38, [#allocation5], 128, 128, 8
    $region17: #{actor_critic_forward.1} parent=1 // pred_fallthru
      _
    // Predicated region
    $region18: #{actor_critic_forward.1} parent=1 // pred_check
      _
    $region19: #{actor_critic_forward.1} parent=1 // pred_check_branch
      %45 = sbr.rel (0) target = $region21
    $region20: #{actor_critic_forward.1} parent=1 // pred_region
      _
    $region21: #{actor_critic_forward.1} parent=1 // pred_fallthru
      _
    // Predicated region
    $region22: #{actor_critic_forward.1} parent=1 // pred_check
      _
    $region23: #{actor_critic_forward.1} parent=1 // pred_check_branch
      %47 = sbr.rel (0) target = $region25
    $region24: #{actor_critic_forward.1} parent=1 // pred_region
      _
    $region25: #{actor_critic_forward.1} parent=1 // pred_fallthru
      _
    // Predicated region
    $region26: #{actor_critic_forward.1} parent=1 // pred_check
      _
    $region27: #{actor_critic_forward.1} parent=1 // pred_check_branch
      %49 = sbr.rel (0) target = $region29
    $region28: #{actor_critic_forward.1} parent=1 // pred_region
      _
    $region29: #{actor_critic_forward.1} parent=1 // pred_fallthru
      _
    // Predicated region
    $region30: #{actor_critic_forward.1} parent=1 // pred_check
      _
    $region31: #{actor_critic_forward.1} parent=1 // pred_check_branch
      %51 = sbr.rel (0) target = $region33
    $region32: #{actor_critic_forward.1} parent=1 // pred_region
      %52 = dma.done [#allocation3], 1024
    $region33: #{actor_critic_forward.1} parent=1 // pred_fallthru
      _
    // Predicated region
    $region34: #{actor_critic_forward.1} parent=1 // pred_check
      _
    $region35: #{actor_critic_forward.1} parent=1 // pred_check_branch
      %54 = sbr.rel (0) target = $region37
    $region36: #{actor_critic_forward.1} parent=1 // pred_region
      %55 = dma.done [#allocation5], 2048
    $region37: #{actor_critic_forward.1} parent=1 // pred_fallthru
      _
    %v57 = vld [vmem:[%s0] sm:$0xf]
    %v58 = vld [vmem:[#allocation2] sm:$0xff]
    %v59 = vld [vmem:[#allocation2 + $0x8] sm:$0xff]
    %v60 = vld [vmem:[#allocation2 + $0x10] sm:$0xff]
    %v61 = vld [vmem:[#allocation2 + $0x18] sm:$0xff]
    %v62 = vld [vmem:[#allocation2 + $0x20] sm:$0xff]
    %v63 = vld [vmem:[#allocation2 + $0x28] sm:$0xff]
    %v64 = vld [vmem:[#allocation2 + $0x30] sm:$0xff]
    %v65 = vld [vmem:[#allocation2 + $0x38] sm:$0xff]
    %v66 = vld [vmem:[%s2] sm:$0x3]
    %v68 = vlaneseq
    %v69 = vshrl.u32 %v68, 7
    %v70 = vsub.s32 0, %v69
    %v71 = vrot.slane %v66, %v70
    %v72 = vlaneseq
    %v73 = vshrl.u32 %v72, 7
    %v74 = vsub.s32 1, %v73
    %v75 = vrot.slane %v66, %v74
    %v86 = vunpack.c.l.b16 %v58
    %v87 = vunpack.c.h.b16 %v58
    %v88 = vunpack.c.l.b16 %v59
    %v89 = vunpack.c.h.b16 %v59
    %v90 = vunpack.c.l.b16 %v60
    %v91 = vunpack.c.h.b16 %v60
    %v92 = vunpack.c.l.b16 %v61
    %v93 = vunpack.c.h.b16 %v61
    %v94 = vunpack.c.l.b16 %v62
    %v95 = vunpack.c.h.b16 %v62
    %v96 = vunpack.c.l.b16 %v63
    %v97 = vunpack.c.h.b16 %v63
    %v98 = vunpack.c.l.b16 %v64
    %v99 = vunpack.c.h.b16 %v64
    %v100 = vunpack.c.l.b16 %v65
    %v101 = vunpack.c.h.b16 %v65
    %v102 = vpack.c.b16 %v88, %v86
    %v103 = vpack.c.b16 %v89, %v87
    %v104 = vpack.c.b16 %v92, %v90
    %v105 = vpack.c.b16 %v93, %v91
    %v106 = vpack.c.b16 %v96, %v94
    %v107 = vpack.c.b16 %v97, %v95
    %v108 = vpack.c.b16 %v100, %v98
    %v109 = vpack.c.b16 %v101, %v99
    %vm118 = vcmask 523264
    %v120 = vsel %vm118, %v57, 0
    %122 = vmatprep.subr.bf16.mxu0 0
    %123 = vmatpush1.bf16.msra.mxu0 0
    %124 = vmatprep.subr.bf16.mxu0 0
    %125 = vmatpush1.bf16.msra.mxu0 0
    %126 = vmatprep.subr.bf16.mxu0 0
    %127 = vmatpush1.bf16.msra.mxu0 0
    %128 = vmatprep.subr.bf16.mxu0 0
    %129 = vmatpush1.bf16.msra.mxu0 0
    %130 = vmatprep.subr.bf16.mxu0 %v109
    %131 = vmatpush1.bf16.msra.mxu0 %v108
    %132 = vmatprep.subr.bf16.mxu0 %v107
    %133 = vmatpush1.bf16.msra.mxu0 %v106
    %134 = vmatprep.subr.bf16.mxu0 %v105
    %135 = vmatpush1.bf16.msra.mxu0 %v104
    %136 = vmatprep.subr.bf16.mxu0 %v103
    %137 = vmatpush1.bf16.msra.mxu0 %v102
    %138 = vmatprep.subr.bf16.mxu0 0
    %139 = vmatpush2.bf16.msra.mxu0 0
    %140 = vmatprep.subr.bf16.mxu0 0
    %141 = vmatpush2.bf16.msra.mxu0 0
    %142 = vmatprep.subr.bf16.mxu0 0
    %143 = vmatpush2.bf16.msra.mxu0 0
    %144 = vmatprep.subr.bf16.mxu0 0
    %145 = vmatpush2.bf16.msra.mxu0 0
    %146 = vmatprep.subr.bf16.mxu0 0
    %147 = vmatpush2.bf16.msra.mxu0 0
    %148 = vmatprep.subr.bf16.mxu0 0
    %149 = vmatpush2.bf16.msra.mxu0 0
    %150 = vmatprep.subr.bf16.mxu0 0
    %151 = vmatpush2.bf16.msra.mxu0 0
    %152 = vmatprep.subr.bf16.mxu0 0
    %153 = vmatpush2.bf16.msra.mxu0 0
    %154 = vmatprep.mubr.bf16.mxu0 0
    %155 = vmatmul.mubr.bf16.gmra.mxu0 %v120
    %v156 = vpop.f32.mrf.mxu0
    %v157 = vadd.f32 %v71, %v156
    %v158 = vpop.f32.mrf.mxu0
    %v159 = vadd.f32 %v75, %v158
    %v160 = vpop.f32.mrf.mxu0
    %v161 = vpop.f32.mrf.mxu0
    %162 = vdwg.mxu0
    %v163 = vmax.f32 %v157, 0.0
    %v164 = vmax.f32 %v159, 0.0
    %v165 = vpack.c.bf16 %v163, %v163
    %v166 = vld [vmem:[#allocation4] sm:$0xff]
    %v167 = vld [vmem:[#allocation4 + $0x8] sm:$0xff]
    %v168 = vld [vmem:[#allocation4 + $0x10] sm:$0xff]
    %v169 = vld [vmem:[#allocation4 + $0x18] sm:$0xff]
    %v170 = vld [vmem:[#allocation4 + $0x20] sm:$0xff]
    %v171 = vld [vmem:[#allocation4 + $0x28] sm:$0xff]
    %v172 = vld [vmem:[#allocation4 + $0x30] sm:$0xff]
    %v173 = vld [vmem:[#allocation4 + $0x38] sm:$0xff]
    %v174 = vld [vmem:[#allocation4 + $0x40] sm:$0xff]
    %v175 = vld [vmem:[#allocation4 + $0x48] sm:$0xff]
    %v176 = vld [vmem:[#allocation4 + $0x50] sm:$0xff]
    %v177 = vld [vmem:[#allocation4 + $0x58] sm:$0xff]
    %v178 = vld [vmem:[#allocation4 + $0x60] sm:$0xff]
    %v179 = vld [vmem:[#allocation4 + $0x68] sm:$0xff]
    %v180 = vld [vmem:[#allocation4 + $0x70] sm:$0xff]
    %v181 = vld [vmem:[#allocation4 + $0x78] sm:$0xff]
    %v182 = vld [vmem:[%s4] sm:$0x3]
    %v184 = vlaneseq
    %v185 = vshrl.u32 %v184, 7
    %v186 = vsub.s32 0, %v185
    %v187 = vrot.slane %v182, %v186
    %v188 = vlaneseq
    %v189 = vshrl.u32 %v188, 7
    %v190 = vsub.s32 1, %v189
    %v191 = vrot.slane %v182, %v190
    %v210 = vunpack.c.l.b16 %v166
    %v211 = vunpack.c.h.b16 %v166
    %v212 = vunpack.c.l.b16 %v167
    %v213 = vunpack.c.h.b16 %v167
    %v214 = vunpack.c.l.b16 %v168
    %v215 = vunpack.c.h.b16 %v168
    %v216 = vunpack.c.l.b16 %v169
    %v217 = vunpack.c.h.b16 %v169
    %v218 = vunpack.c.l.b16 %v170
    %v219 = vunpack.c.h.b16 %v170
    %v220 = vunpack.c.l.b16 %v171
    %v221 = vunpack.c.h.b16 %v171
    %v222 = vunpack.c.l.b16 %v172
    %v223 = vunpack.c.h.b16 %v172
    %v224 = vunpack.c.l.b16 %v173
    %v225 = vunpack.c.h.b16 %v173
    %v226 = vunpack.c.l.b16 %v174
    %v227 = vunpack.c.h.b16 %v174
    %v228 = vunpack.c.l.b16 %v175
    %v229 = vunpack.c.h.b16 %v175
    %v230 = vunpack.c.l.b16 %v176
    %v231 = vunpack.c.h.b16 %v176
    %v232 = vunpack.c.l.b16 %v177
    %v233 = vunpack.c.h.b16 %v177
    %v234 = vunpack.c.l.b16 %v178
    %v235 = vunpack.c.h.b16 %v178
    %v236 = vunpack.c.l.b16 %v179
    %v237 = vunpack.c.h.b16 %v179
    %v238 = vunpack.c.l.b16 %v180
    %v239 = vunpack.c.h.b16 %v180
    %v240 = vunpack.c.l.b16 %v181
    %v241 = vunpack.c.h.b16 %v181
    %v242 = vpack.c.b16 %v212, %v210
    %v243 = vpack.c.b16 %v213, %v211
    %v244 = vpack.c.b16 %v216, %v214
    %v245 = vpack.c.b16 %v217, %v215
    %v246 = vpack.c.b16 %v220, %v218
    %v247 = vpack.c.b16 %v221, %v219
    %v248 = vpack.c.b16 %v224, %v222
    %v249 = vpack.c.b16 %v225, %v223
    %v250 = vpack.c.b16 %v228, %v226
    %v251 = vpack.c.b16 %v229, %v227
    %v252 = vpack.c.b16 %v232, %v230
    %v253 = vpack.c.b16 %v233, %v231
    %v254 = vpack.c.b16 %v236, %v234
    %v255 = vpack.c.b16 %v237, %v235
    %v256 = vpack.c.b16 %v240, %v238
    %v257 = vpack.c.b16 %v241, %v239
    %274 = vmatprep.subr.bf16.mxu0 %v257
    %275 = vmatpush1.bf16.msra.mxu0 %v256
    %276 = vmatprep.subr.bf16.mxu0 %v255
    %277 = vmatpush1.bf16.msra.mxu0 %v254
    %278 = vmatprep.subr.bf16.mxu0 %v253
    %279 = vmatpush1.bf16.msra.mxu0 %v252
    %280 = vmatprep.subr.bf16.mxu0 %v251
    %281 = vmatpush1.bf16.msra.mxu0 %v250
    %282 = vmatprep.subr.bf16.mxu0 %v249
    %283 = vmatpush1.bf16.msra.mxu0 %v248
    %284 = vmatprep.subr.bf16.mxu0 %v247
    %285 = vmatpush1.bf16.msra.mxu0 %v246
    %286 = vmatprep.subr.bf16.mxu0 %v245
    %287 = vmatpush1.bf16.msra.mxu0 %v244
    %288 = vmatprep.subr.bf16.mxu0 %v243
    %289 = vmatpush1.bf16.msra.mxu0 %v242
    %290 = vmatprep.subr.bf16.mxu0 0
    %291 = vmatpush2.bf16.msra.mxu0 0
    %292 = vmatprep.subr.bf16.mxu0 0
    %293 = vmatpush2.bf16.msra.mxu0 0
    %294 = vmatprep.subr.bf16.mxu0 0
    %295 = vmatpush2.bf16.msra.mxu0 0
    %296 = vmatprep.subr.bf16.mxu0 0
    %297 = vmatpush2.bf16.msra.mxu0 0
    %298 = vmatprep.subr.bf16.mxu0 0
    %299 = vmatpush2.bf16.msra.mxu0 0
    %300 = vmatprep.subr.bf16.mxu0 0
    %301 = vmatpush2.bf16.msra.mxu0 0
    %302 = vmatprep.subr.bf16.mxu0 0
    %303 = vmatpush2.bf16.msra.mxu0 0
    %304 = vmatprep.subr.bf16.mxu0 0
    %305 = vmatpush2.bf16.msra.mxu0 0
    %306 = vmatprep.mubr.bf16.mxu0 0
    %307 = vmatmul.mubr.bf16.gmra.mxu0 %v165
    %v308 = vpop.f32.mrf.mxu0
    %v309 = vadd.f32 %v187, %v308
    %v310 = vpop.f32.mrf.mxu0
    %v311 = vadd.f32 %v191, %v310
    %v312 = vpop.f32.mrf.mxu0
    %v313 = vpop.f32.mrf.mxu0
    %314 = vdwg.mxu0
    %v315 = vpack.c.bf16 %v309, %v309
    %v316 = vpack.c.bf16 %v311, %v311
    %v319 = vunpack.c.l.b16 %v315
    %v320 = vunpack.c.l.b16 %v316
    %v321 = vpack.c.b16 %v320, %v319
    %323 = vst [vmem:[%s7] sm:$0xff] %v321
    %v324 = vld [vmem:[%s5] sm:$0x1]
    %v326 = vlaneseq
    %v327 = vshrl.u32 %v326, 7
    %v328 = vsub.s32 0, %v327
    %v329 = vrot.slane %v324, %v328
    %v331 = vmul.f32 %v164, %v329
    %332 = vadd.xlane.f32.xlu0 %v331
    %v333 = vpop.xlane.xlu0 %332
    %v334 = vld [vmem:[%s6] sm:$0x1]
    %v336 = vlaneseq
    %v337 = vshrl.u32 %v336, 7
    %v338 = vsub.s32 0, %v337
    %v339 = vrot.slane %v334, %v338
    %v341 = vadd.f32 %v333, %v339
    %342 = vst [vmem:[%s8] sm:$0xff] %v341
    // Predicated region
    $region38: #{actor_critic_forward.1} parent=1 // pred_check
      _
    $region39: #{actor_critic_forward.1} parent=1 // pred_check_branch
      %344 = sbr.rel (0) target = $region41
    $region40: #{actor_critic_forward.1} parent=1 // pred_region
      _
    $region41: #{actor_critic_forward.1} parent=1 // pred_fallthru
      _
    // Predicated region
    $region42: #{actor_critic_forward.1} parent=1 // pred_check
      _
    $region43: #{actor_critic_forward.1} parent=1 // pred_check_branch
      %346 = sbr.rel (0) target = $region45
    $region44: #{actor_critic_forward.1} parent=1 // pred_region
      _
    $region45: #{actor_critic_forward.1} parent=1 // pred_fallthru
      _
    // Predicated region
    $region46: #{actor_critic_forward.1} parent=1 // pred_check
      _
    $region47: #{actor_critic_forward.1} parent=1 // pred_check_branch
      %348 = sbr.rel (0) target = $region49
    $region48: #{actor_critic_forward.1} parent=1 // pred_region
      _
    $region49: #{actor_critic_forward.1} parent=1 // pred_fallthru
      _
    // Predicated region
    $region50: #{actor_critic_forward.1} parent=1 // pred_check
      _
    $region51: #{actor_critic_forward.1} parent=1 // pred_check_branch
      %350 = sbr.rel (0) target = $region53
    $region52: #{actor_critic_forward.1} parent=1 // pred_region
      _
    $region53: #{actor_critic_forward.1} parent=1 // pred_fallthru
      _
    %351 = vsyncpa [#allocation3], 1
    %352 = vsyncpa [#allocation5], 1

</llo_original>
